<compile_context>
chip_gen: v6e
topology: v6e:2x2x1
jax: 0.10.0
libtpu: 0.0.40
codegen_flags: <defaults>
</compile_context>

<pallas_src>
import functools

import jax
import jax.numpy as jnp
from jax.experimental import pallas as pl
from jax.experimental.pallas import tpu as pltpu


def _round_up(n, m):
    return ((n + m - 1) // m) * m


def _pad_to(x, rows, cols):
    r, c = x.shape
    return jnp.pad(x, ((0, rows - r), (0, cols - c)))


def _dqn_kernel(x_ref, w1_ref, b1_ref, w2_ref, b2_ref, w3_ref, b3_ref, o_ref):
    # ---- Layer 1 on the VPU --------------------------------------------------
    # K0 (observation dim padded to 8) is tiny; an MXU matmul would pad K up to a
    # full contraction pass.  Do K0 broadcast-FMAs in f32 instead: the work lands
    # on otherwise-idle VALU slots and skips one MXU drain.
    x = x_ref[...].astype(jnp.float32)             # (tb, K0), K0 == 8 (tiny)
    w1 = w1_ref[...].astype(jnp.float32)           # (K0, H)
    h = b1_ref[...] + x[:, 0:1] * w1[0:1, :]       # (tb, H) f32
    for k in range(1, x_ref.shape[1]):             # static unroll, K0-1 FMAs
        h = h + x[:, k:k + 1] * w1[k:k + 1, :]
    h = jnp.maximum(h, 0.0)

    # ---- Layers 2 & 3 on the MXU (bf16 inputs, f32 accumulation) --------------
    h = jnp.dot(h.astype(jnp.bfloat16), w2_ref[...],
                preferred_element_type=jnp.float32)
    h = jnp.maximum(h + b2_ref[...], 0.0)
    h = jnp.dot(h.astype(jnp.bfloat16), w3_ref[...],
                preferred_element_type=jnp.float32)
    h = h + b3_ref[...]

    # ---- Narrow writeback ------------------------------------------------------
    # Only the real action columns go back to HBM (masked vst); the zero-padded
    # Q columns never leave VMEM.
    n_act = o_ref.shape[-1]
    o_ref[...] = h[:, :n_act].astype(o_ref.dtype)


def init_dqn_params(key, n_observations, n_actions, hidden=128):
    """nn.Linear-style init: uniform(-1/sqrt(fan_in), 1/sqrt(fan_in)).

    Weights are returned as (in_features, out_features), f32, unpadded.
    """
    ks = jax.random.split(key, 6)

    def linear(kw, kb, fan_in, fan_out):
        bound = 1.0 / jnp.sqrt(fan_in)
        w = jax.random.uniform(kw, (fan_in, fan_out), jnp.float32, -bound, bound)
        b = jax.random.uniform(kb, (fan_out,), jnp.float32, -bound, bound)
        return w, b

    w1, b1 = linear(ks[0], ks[1], n_observations, hidden)
    w2, b2 = linear(ks[2], ks[3], hidden, hidden)
    w3, b3 = linear(ks[4], ks[5], hidden, n_actions)
    return (w1, b1, w2, b2, w3, b3)


def prepare_dqn_params(params):
    """One-time pad + cast of the parameters to kernel-ready layout.

    Weights -> bf16, tile-aligned: w1:(K0,H), w2:(H,H), w3:(H,A).
    Biases  -> f32, shapes (1,H)/(1,H)/(1,A).
    K0 is padded only to a multiple of 8 (sublane), H/A to multiples of 128 (lane).
    """
    w1, b1, w2, b2, w3, b3 = params
    n_obs, hidden = w1.shape
    n_actions = w3.shape[1]
    K0 = _round_up(max(n_obs, 8), 8)       # small sublane-only pad for layer-1 K dim
    H = _round_up(hidden, 128)
    A = _round_up(n_actions, 128)

    w1_p = _pad_to(w1, K0, H).astype(jnp.bfloat16)
    w2_p = _pad_to(w2, H, H).astype(jnp.bfloat16)
    w3_p = _pad_to(w3, H, A).astype(jnp.bfloat16)
    b1_p = _pad_to(b1.reshape(1, -1), 1, H).astype(jnp.float32)
    b2_p = _pad_to(b2.reshape(1, -1), 1, H).astype(jnp.float32)
    b3_p = _pad_to(b3.reshape(1, -1), 1, A).astype(jnp.float32)
    return (w1_p, b1_p, w2_p, b2_p, w3_p, b3_p)


_MAX_BATCH_TILE = 2048   # rows per grid step (~3 MiB VMEM incl. double buffers)
_SPLIT_ROWS = 64         # batches above this always get >= 2 grid steps (v7x)
_ROW_ALIGN = 16          # sublane alignment for the bf16 activation tile


@functools.partial(jax.jit, static_argnames=("n_actions",))
def dqn_forward(x, padded_params, n_actions):
    """x: (B, n_observations) float32. padded_params from prepare_dqn_params.

    Returns (B, n_actions) float32 Q-values.
    """
    w1, b1, w2, b2, w3, b3 = padded_params
    B, _ = x.shape
    K0, H = w1.shape
    A = w3.shape[1]

    # Batch tiling: tiny (action-selection) batches run as one block; anything
    # larger is split into >= 2 blocks so both v7x TensorCores get work via the
    # "parallel" axis.  The tile is derived from cdiv so only a few alignment rows
    # are ever padded, never a full dead tile.
    Bp = _round_up(max(B, _ROW_ALIGN), _ROW_ALIGN)
    if Bp <= _SPLIT_ROWS:
        num_blocks, tb = 1, Bp
    else:
        num_blocks = max(2, pl.cdiv(Bp, _MAX_BATCH_TILE))
        tb = _round_up(pl.cdiv(Bp, num_blocks), _ROW_ALIGN)
        Bp = num_blocks * tb

    # Only the small activation is padded/cast per call (bf16 halves its DMA);
    # weights/biases were padded and cast once in prepare_dqn_params.
    x_p = _pad_to(x.astype(jnp.bfloat16), Bp, K0)

    flops = 2 * Bp * (K0 * H + H * H + H * A)
    bytes_accessed = (
        Bp * K0 * 2                      # x in (bf16)
        + (K0 * H + H * H + H * A) * 2   # weights (bf16, VMEM-resident)
        + (2 * H + A) * 4                # biases (f32)
        + Bp * n_actions * 4             # narrow f32 output
    )

    def const2d(shape):
        # Constant block index -> stays VMEM-resident across all grid steps.
        return pl.BlockSpec(shape, lambda i: (0, 0))

    out = pl.pallas_call(
        _dqn_kernel,
        out_shape=jax.ShapeDtypeStruct((Bp, n_actions), jnp.float32),
        grid_spec=pltpu.PrefetchScalarGridSpec(
            num_scalar_prefetch=0,
            grid=(num_blocks,),
            in_specs=[
                pl.BlockSpec((tb, K0), lambda i: (i, 0)),   # x (batch-tiled)
                const2d((K0, H)),                           # w1
                const2d((1, H)),                            # b1
                const2d((H, H)),                            # w2
                const2d((1, H)),                            # b2
                const2d((H, A)),                            # w3
                const2d((1, A)),                            # b3
            ],
            out_specs=pl.BlockSpec((tb, n_actions), lambda i: (i, 0)),
        ),
        compiler_params=pltpu.CompilerParams(
            dimension_semantics=("parallel",),
        ),
        cost_estimate=pl.CostEstimate(
            flops=flops, transcendentals=0, bytes_accessed=bytes_accessed
        ),
    )(x_p, w1, b1, w2, b2, w3, b3)

    return out[:B]


# TODO(synk): for the full DQN training step, fuse the online- and target-network
# forwards (plus the Q(s,a) gather / target row-max and TD-target math) into one
# pallas_call sharing this grid — halves dispatch overhead and weight DMA per step,
# which dominates wall-clock at CartPole sizes.  Any in-kernel max/argmax must mask
# the zero-padded action columns >= n_actions.


if __name__ == "__main__":
    key = jax.random.PRNGKey(0)
    k_param, k_x1, k_x2 = jax.random.split(key, 3)

    n_observations = 4   # CartPole-v1 observation size
    n_actions = 2        # CartPole-v1 action space

    params = init_dqn_params(k_param, n_observations, n_actions)
    padded_params = prepare_dqn_params(params)   # one-time pad/cast

    def ref_forward(x):
        # Pure-JAX f32 reference of the same MLP (kernel uses bf16 weights /
        # bf16 activations with f32 accumulation -> bf16-level tolerance).
        w1, b1, w2, b2, w3, b3 = params
        h = jnp.maximum(x @ w1 + b1, 0.0)
        h = jnp.maximum(h @ w2 + b2, 0.0)
        return h @ w3 + b3

    # Tiny action-selection batch (single-block path).
    x_small = jax.random.normal(k_x1, (2, n_observations), jnp.float32)
    q_small = dqn_forward(x_small, padded_params, n_actions)
    jax.block_until_ready(q_small)
    ref_small = ref_forward(x_small)
    assert q_small.shape == (2, n_actions)
    assert jnp.allclose(q_small, ref_small, atol=2e-2, rtol=2e-2), (
        f"max abs err {jnp.max(jnp.abs(q_small - ref_small))}"
    )

    # Replay-buffer-sized batch (multi-step "parallel" grid + row-padding path).
    x_large = jax.random.normal(k_x2, (130, n_observations), jnp.float32)
    q_large = dqn_forward(x_large, padded_params, n_actions)
    jax.block_until_ready(q_large)
    ref_large = ref_forward(x_large)
    assert q_large.shape == (130, n_actions)
    assert jnp.allclose(q_large, ref_large, atol=2e-2, rtol=2e-2), (
        f"max abs err {jnp.max(jnp.abs(q_large - ref_large))}"
    )

    print("KERNEL_OK")
</pallas_src>

<mosaic_0001>
module attributes {stable_mosaic.version = 11 : i64} {
  func.func @_dqn_kernel(%arg0: i32, %arg1: memref<16x8xbf16, #tpu.memory_space<vmem>>, %arg2: memref<8x128xbf16, #tpu.memory_space<vmem>>, %arg3: memref<1x128xf32, #tpu.memory_space<vmem>>, %arg4: memref<128x128xbf16, #tpu.memory_space<vmem>>, %arg5: memref<1x128xf32, #tpu.memory_space<vmem>>, %arg6: memref<128x128xbf16, #tpu.memory_space<vmem>>, %arg7: memref<1x128xf32, #tpu.memory_space<vmem>>, %arg8: memref<16x2xf32, #tpu.memory_space<vmem>>) attributes {dimension_semantics = [#tpu.dimension_semantics<parallel>], iteration_bounds = array<i64: 1>, scalar_prefetch = 0 : i64, scratch_operands = 0 : i64, tpu.core_type = #tpu.core_type<tc>, window_params = [{transform_indices = @transform_0, window_bounds = array<i64: 16, 8>}, {pipeline_mode = #tpu.pipeline_mode<synchronous>, transform_indices = @transform_1, window_bounds = array<i64: 8, 128>}, {pipeline_mode = #tpu.pipeline_mode<synchronous>, transform_indices = @transform_2, window_bounds = array<i64: 1, 128>}, {pipeline_mode = #tpu.pipeline_mode<synchronous>, transform_indices = @transform_3, window_bounds = array<i64: 128, 128>}, {pipeline_mode = #tpu.pipeline_mode<synchronous>, transform_indices = @transform_4, window_bounds = array<i64: 1, 128>}, {pipeline_mode = #tpu.pipeline_mode<synchronous>, transform_indices = @transform_5, window_bounds = array<i64: 128, 128>}, {pipeline_mode = #tpu.pipeline_mode<synchronous>, transform_indices = @transform_6, window_bounds = array<i64: 1, 128>}, {transform_indices = @transform_7, window_bounds = array<i64: 16, 2>}]} {
    %c0 = arith.constant 0 : index
    %c0_0 = arith.constant 0 : index
    %0 = vector.load %arg1[%c0, %c0_0] : memref<16x8xbf16, #tpu.memory_space<vmem>>, vector<16x8xbf16>
    %1 = arith.extf %0 : vector<16x8xbf16> to vector<16x8xf32>
    %c0_1 = arith.constant 0 : index
    %c0_2 = arith.constant 0 : index
    %2 = vector.load %arg2[%c0_1, %c0_2] : memref<8x128xbf16, #tpu.memory_space<vmem>>, vector<8x128xbf16>
    %3 = arith.extf %2 : vector<8x128xbf16> to vector<8x128xf32>
    %c0_3 = arith.constant 0 : index
    %c0_4 = arith.constant 0 : index
    %4 = vector.load %arg3[%c0_3, %c0_4] : memref<1x128xf32, #tpu.memory_space<vmem>>, vector<1x128xf32>
    %5 = vector.extract_strided_slice %1 {offsets = [0, 0], sizes = [16, 1], strides = [1, 1]} : vector<16x8xf32> to vector<16x1xf32>
    %6 = vector.extract_strided_slice %3 {offsets = [0, 0], sizes = [1, 128], strides = [1, 1]} : vector<8x128xf32> to vector<1x128xf32>
    %7 = vector.broadcast %5 : vector<16x1xf32> to vector<16x128xf32>
    %8 = vector.broadcast %6 : vector<1x128xf32> to vector<16x128xf32>
    %9 = arith.mulf %7, %8 : vector<16x128xf32>
    %10 = vector.broadcast %4 : vector<1x128xf32> to vector<16x128xf32>
    %11 = arith.addf %10, %9 : vector<16x128xf32>
    %12 = vector.extract_strided_slice %1 {offsets = [0, 1], sizes = [16, 1], strides = [1, 1]} : vector<16x8xf32> to vector<16x1xf32>
    %13 = vector.extract_strided_slice %3 {offsets = [1, 0], sizes = [1, 128], strides = [1, 1]} : vector<8x128xf32> to vector<1x128xf32>
    %14 = vector.broadcast %12 : vector<16x1xf32> to vector<16x128xf32>
    %15 = vector.broadcast %13 : vector<1x128xf32> to vector<16x128xf32>
    %16 = arith.mulf %14, %15 : vector<16x128xf32>
    %17 = arith.addf %11, %16 : vector<16x128xf32>
    %18 = vector.extract_strided_slice %1 {offsets = [0, 2], sizes = [16, 1], strides = [1, 1]} : vector<16x8xf32> to vector<16x1xf32>
    %19 = vector.extract_strided_slice %3 {offsets = [2, 0], sizes = [1, 128], strides = [1, 1]} : vector<8x128xf32> to vector<1x128xf32>
    %20 = vector.broadcast %18 : vector<16x1xf32> to vector<16x128xf32>
    %21 = vector.broadcast %19 : vector<1x128xf32> to vector<16x128xf32>
    %22 = arith.mulf %20, %21 : vector<16x128xf32>
    %23 = arith.addf %17, %22 : vector<16x128xf32>
    %24 = vector.extract_strided_slice %1 {offsets = [0, 3], sizes = [16, 1], strides = [1, 1]} : vector<16x8xf32> to vector<16x1xf32>
    %25 = vector.extract_strided_slice %3 {offsets = [3, 0], sizes = [1, 128], strides = [1, 1]} : vector<8x128xf32> to vector<1x128xf32>
    %26 = vector.broadcast %24 : vector<16x1xf32> to vector<16x128xf32>
    %27 = vector.broadcast %25 : vector<1x128xf32> to vector<16x128xf32>
    %28 = arith.mulf %26, %27 : vector<16x128xf32>
    %29 = arith.addf %23, %28 : vector<16x128xf32>
    %30 = vector.extract_strided_slice %1 {offsets = [0, 4], sizes = [16, 1], strides = [1, 1]} : vector<16x8xf32> to vector<16x1xf32>
    %31 = vector.extract_strided_slice %3 {offsets = [4, 0], sizes = [1, 128], strides = [1, 1]} : vector<8x128xf32> to vector<1x128xf32>
    %32 = vector.broadcast %30 : vector<16x1xf32> to vector<16x128xf32>
    %33 = vector.broadcast %31 : vector<1x128xf32> to vector<16x128xf32>
    %34 = arith.mulf %32, %33 : vector<16x128xf32>
    %35 = arith.addf %29, %34 : vector<16x128xf32>
    %36 = vector.extract_strided_slice %1 {offsets = [0, 5], sizes = [16, 1], strides = [1, 1]} : vector<16x8xf32> to vector<16x1xf32>
    %37 = vector.extract_strided_slice %3 {offsets = [5, 0], sizes = [1, 128], strides = [1, 1]} : vector<8x128xf32> to vector<1x128xf32>
    %38 = vector.broadcast %36 : vector<16x1xf32> to vector<16x128xf32>
    %39 = vector.broadcast %37 : vector<1x128xf32> to vector<16x128xf32>
    %40 = arith.mulf %38, %39 : vector<16x128xf32>
    %41 = arith.addf %35, %40 : vector<16x128xf32>
    %42 = vector.extract_strided_slice %1 {offsets = [0, 6], sizes = [16, 1], strides = [1, 1]} : vector<16x8xf32> to vector<16x1xf32>
    %43 = vector.extract_strided_slice %3 {offsets = [6, 0], sizes = [1, 128], strides = [1, 1]} : vector<8x128xf32> to vector<1x128xf32>
    %44 = vector.broadcast %42 : vector<16x1xf32> to vector<16x128xf32>
    %45 = vector.broadcast %43 : vector<1x128xf32> to vector<16x128xf32>
    %46 = arith.mulf %44, %45 : vector<16x128xf32>
    %47 = arith.addf %41, %46 : vector<16x128xf32>
    %48 = vector.extract_strided_slice %1 {offsets = [0, 7], sizes = [16, 1], strides = [1, 1]} : vector<16x8xf32> to vector<16x1xf32>
    %49 = vector.extract_strided_slice %3 {offsets = [7, 0], sizes = [1, 128], strides = [1, 1]} : vector<8x128xf32> to vector<1x128xf32>
    %50 = vector.broadcast %48 : vector<16x1xf32> to vector<16x128xf32>
    %51 = vector.broadcast %49 : vector<1x128xf32> to vector<16x128xf32>
    %52 = arith.mulf %50, %51 : vector<16x128xf32>
    %53 = arith.addf %47, %52 : vector<16x128xf32>
    %cst = arith.constant 0.000000e+00 : f32
    %54 = vector.broadcast %cst : f32 to vector<16x128xf32>
    %55 = arith.maximumf %53, %54 : vector<16x128xf32>
    %56 = arith.truncf %55 : vector<16x128xf32> to vector<16x128xbf16>
    %c0_5 = arith.constant 0 : index
    %c0_6 = arith.constant 0 : index
    %57 = vector.load %arg4[%c0_5, %c0_6] : memref<128x128xbf16, #tpu.memory_space<vmem>>, vector<128x128xbf16>
    %cst_7 = arith.constant dense<0.000000e+00> : vector<16x128xf32>
    %58 = tpu.matmul %56, %57, %cst_7 {dimension_numbers = #tpu.dot_dimension_numbers<[1], [0], [0], [1], [0, 0, 1, 1], [], []>} : vector<16x128xbf16>, vector<128x128xbf16>, vector<16x128xf32> -> vector<16x128xf32>
    %c0_8 = arith.constant 0 : index
    %c0_9 = arith.constant 0 : index
    %59 = vector.load %arg5[%c0_8, %c0_9] : memref<1x128xf32, #tpu.memory_space<vmem>>, vector<1x128xf32>
    %60 = vector.broadcast %59 : vector<1x128xf32> to vector<16x128xf32>
    %61 = arith.addf %58, %60 : vector<16x128xf32>
    %cst_10 = arith.constant 0.000000e+00 : f32
    %62 = vector.broadcast %cst_10 : f32 to vector<16x128xf32>
    %63 = arith.maximumf %61, %62 : vector<16x128xf32>
    %64 = arith.truncf %63 : vector<16x128xf32> to vector<16x128xbf16>
    %c0_11 = arith.constant 0 : index
    %c0_12 = arith.constant 0 : index
    %65 = vector.load %arg6[%c0_11, %c0_12] : memref<128x128xbf16, #tpu.memory_space<vmem>>, vector<128x128xbf16>
    %cst_13 = arith.constant dense<0.000000e+00> : vector<16x128xf32>
    %66 = tpu.matmul %64, %65, %cst_13 {dimension_numbers = #tpu.dot_dimension_numbers<[1], [0], [0], [1], [0, 0, 1, 1], [], []>} : vector<16x128xbf16>, vector<128x128xbf16>, vector<16x128xf32> -> vector<16x128xf32>
    %c0_14 = arith.constant 0 : index
    %c0_15 = arith.constant 0 : index
    %67 = vector.load %arg7[%c0_14, %c0_15] : memref<1x128xf32, #tpu.memory_space<vmem>>, vector<1x128xf32>
    %68 = vector.broadcast %67 : vector<1x128xf32> to vector<16x128xf32>
    %69 = arith.addf %66, %68 : vector<16x128xf32>
    %70 = vector.extract_strided_slice %69 {offsets = [0, 0], sizes = [16, 2], strides = [1, 1]} : vector<16x128xf32> to vector<16x2xf32>
    %c0_16 = arith.constant 0 : index
    %c0_17 = arith.constant 0 : index
    %71 = vector.load %arg8[%c0_16, %c0_17] : memref<16x2xf32, #tpu.memory_space<vmem>>, vector<16x2xf32>
    tpu.vector_store %arg8[%c0_16, %c0_17], %70 {strides = array<i32>} : memref<16x2xf32, #tpu.memory_space<vmem>>, vector<16x2xf32>,
    return
  }
  func.func @transform_0(%arg0: i32) -> (i32, i32) {
    %c0_i32 = arith.constant 0 : i32
    %c0_i32_0 = arith.constant 0 : i32
    return %arg0, %c0_i32 : i32, i32
  }
  func.func @transform_1(%arg0: i32) -> (i32, i32) {
    %c0_i32 = arith.constant 0 : i32
    %c0_i32_0 = arith.constant 0 : i32
    %c0_i32_1 = arith.constant 0 : i32
    return %c0_i32, %c0_i32_0 : i32, i32
  }
  func.func @transform_2(%arg0: i32) -> (i32, i32) {
    %c0_i32 = arith.constant 0 : i32
    %c0_i32_0 = arith.constant 0 : i32
    %c0_i32_1 = arith.constant 0 : i32
    return %c0_i32, %c0_i32_0 : i32, i32
  }
  func.func @transform_3(%arg0: i32) -> (i32, i32) {
    %c0_i32 = arith.constant 0 : i32
    %c0_i32_0 = arith.constant 0 : i32
    %c0_i32_1 = arith.constant 0 : i32
    return %c0_i32, %c0_i32_0 : i32, i32
  }
  func.func @transform_4(%arg0: i32) -> (i32, i32) {
    %c0_i32 = arith.constant 0 : i32
    %c0_i32_0 = arith.constant 0 : i32
    %c0_i32_1 = arith.constant 0 : i32
    return %c0_i32, %c0_i32_0 : i32, i32
  }
  func.func @transform_5(%arg0: i32) -> (i32, i32) {
    %c0_i32 = arith.constant 0 : i32
    %c0_i32_0 = arith.constant 0 : i32
    %c0_i32_1 = arith.constant 0 : i32
    return %c0_i32, %c0_i32_0 : i32, i32
  }
  func.func @transform_6(%arg0: i32) -> (i32, i32) {
    %c0_i32 = arith.constant 0 : i32
    %c0_i32_0 = arith.constant 0 : i32
    %c0_i32_1 = arith.constant 0 : i32
    return %c0_i32, %c0_i32_0 : i32, i32
  }
  func.func @transform_7(%arg0: i32) -> (i32, i32) {
    %c0_i32 = arith.constant 0 : i32
    %c0_i32_0 = arith.constant 0 : i32
    return %arg0, %c0_i32 : i32, i32
  }
}

</mosaic_0001>

<llo_original>
// kernel: dqn_forward.1
$region0: #{dqn_forward.1}
  #allocation0 [shape = 'u32[]', space=smem, size = 0x4, offset = 0x4, fixed_abs, tag = 'smem constant byte address 0x4 - core index']
  #allocation1 [shape = 'u32[144,128]{1,0:T(1,128)}', space=vmem, size = 0x12000, scoped, tag = 'internal scratch']
  %s0 = inlined_call_operand.vmem [shape: bf16[16,8], index: 0, kind: input, shape index: {}]
  %s1 = inlined_call_operand.vmem [shape: bf16[8,128], index: 1, kind: input, shape index: {}]
  %s2 = inlined_call_operand.vmem [shape: f32[1,128], index: 2, kind: input, shape index: {}]
  %s3 = inlined_call_operand.hbm [shape: bf16[128,128], index: 3, kind: input, shape index: {}]
  %s4 = inlined_call_operand.vmem [shape: f32[1,128], index: 4, kind: input, shape index: {}]
  %s5 = inlined_call_operand.hbm [shape: bf16[128,128], index: 5, kind: input, shape index: {}]
  %s6 = inlined_call_operand.vmem [shape: f32[1,128], index: 6, kind: input, shape index: {}]
  %s7 = inlined_call_operand.vmem [shape: f32[16,2], index: 7, kind: output, shape index: {}]
  %s8 = sld [smem:[#allocation0]]
  $region46: #{dqn_forward.1} parent=0
    _
  %s10 = ssub.s32 1, %s8
  %s11 = scalar_select 0, %s10, %s8
  $region1: #{dqn_forward.1} parent=0
    #allocation2 [shape = 'u8[32768]{0}', space=vmem, size = 0x8000, scoped, tag = 'input window, operand 3, single buffered']
    #allocation3 [shape = 's32[1]{0}', space=sflag, size = 0x4, scoped, tag = 'scoped memory for dqn_forward.1']
    #allocation4 [shape = 'u8[32768]{0}', space=vmem, size = 0x8000, scoped, tag = 'input window, operand 5, single buffered']
    #allocation5 [shape = 's32[1]{0}', space=sflag, size = 0x4, scoped, tag = 'scoped memory for dqn_forward.1']
    %12 = vsyncpa [#allocation3], 0
    %13 = vsyncpa [#allocation5], 0
    // Predicated region
    $region2: #{dqn_forward.1} parent=1 // pred_check
      _
    $region3: #{dqn_forward.1} parent=1 // pred_check_branch
      %15 = sbr.rel (0) target = $region5
    $region4: #{dqn_forward.1} parent=1 // pred_region
      _
    $region5: #{dqn_forward.1} parent=1 // pred_fallthru
      _
    // Predicated region
    $region6: #{dqn_forward.1} parent=1 // pred_check
      _
    $region7: #{dqn_forward.1} parent=1 // pred_check_branch
      %17 = sbr.rel (0) target = $region9
    $region8: #{dqn_forward.1} parent=1 // pred_region
      _
    $region9: #{dqn_forward.1} parent=1 // pred_fallthru
      _
    // Predicated region
    $region10: #{dqn_forward.1} parent=1 // pred_check
      _
    $region11: #{dqn_forward.1} parent=1 // pred_check_branch
      %19 = sbr.rel (0) target = $region13
    $region12: #{dqn_forward.1} parent=1 // pred_region
      _
    $region13: #{dqn_forward.1} parent=1 // pred_fallthru
      _
    // Predicated region
    $region14: #{dqn_forward.1} parent=1 // pred_check
      _
    $region15: #{dqn_forward.1} parent=1 // pred_check_branch
      %21 = sbr.rel (0) target = $region17
    $region16: #{dqn_forward.1} parent=1 // pred_region
      %s23 = ssub.s32 1024, 1024
      %24 = vsyncadd [#allocation3], %s23
      %s25 = sshll.u32 [#allocation2], 4
      %s26 = int_to_ptr.vmem [resolvable:$true] %s25
      %31 = dma.hbm_to_vmem [thread:$0]  %s3, 1024, %s26, [#allocation3], 64, 64, 4
    $region17: #{dqn_forward.1} parent=1 // pred_fallthru
      _
    // Predicated region
    $region18: #{dqn_forward.1} parent=1 // pred_check
      _
    $region19: #{dqn_forward.1} parent=1 // pred_check_branch
      %33 = sbr.rel (0) target = $region21
    $region20: #{dqn_forward.1} parent=1 // pred_region
      _
    $region21: #{dqn_forward.1} parent=1 // pred_fallthru
      _
    // Predicated region
    $region22: #{dqn_forward.1} parent=1 // pred_check
      _
    $region23: #{dqn_forward.1} parent=1 // pred_check_branch
      %35 = sbr.rel (0) target = $region25
    $region24: #{dqn_forward.1} parent=1 // pred_region
      %s37 = ssub.s32 1024, 1024
      %38 = vsyncadd [#allocation5], %s37
      %s39 = sshll.u32 [#allocation4], 4
      %s40 = int_to_ptr.vmem [resolvable:$true] %s39
      %45 = dma.hbm_to_vmem [thread:$0]  %s5, 1024, %s40, [#allocation5], 64, 64, 4
    $region25: #{dqn_forward.1} parent=1 // pred_fallthru
      _
    // Predicated region
    $region26: #{dqn_forward.1} parent=1 // pred_check
      _
    $region27: #{dqn_forward.1} parent=1 // pred_check_branch
      %47 = sbr.rel (0) target = $region29
    $region28: #{dqn_forward.1} parent=1 // pred_region
      _
    $region29: #{dqn_forward.1} parent=1 // pred_fallthru
      _
    // Predicated region
    $region30: #{dqn_forward.1} parent=1 // pred_check
      _
    $region31: #{dqn_forward.1} parent=1 // pred_check_branch
      %49 = sbr.rel (0) target = $region33
    $region32: #{dqn_forward.1} parent=1 // pred_region
      %50 = dma.done [#allocation3], 1024
    $region33: #{dqn_forward.1} parent=1 // pred_fallthru
      _
    // Predicated region
    $region34: #{dqn_forward.1} parent=1 // pred_check
      _
    $region35: #{dqn_forward.1} parent=1 // pred_check_branch
      %52 = sbr.rel (0) target = $region37
    $region36: #{dqn_forward.1} parent=1 // pred_region
      %53 = dma.done [#allocation5], 1024
    $region37: #{dqn_forward.1} parent=1 // pred_fallthru
      _
    %v55 = vld [vmem:[%s0] sm:$0xf]
    %v56 = vld [vmem:[%s0 + $0x4] sm:$0xf]
    %v57 = vunpack.c.l.bf16 %v55
    %v58 = vunpack.c.l.bf16 %v56
    %v59 = vld [vmem:[%s1] sm:$0xf]
    %v60 = vunpack.c.l.bf16 %v59
    %v61 = vld [vmem:[%s2] sm:$0x1]
    %63 = vset.pattern.permute.xlu0 0
    %64 = vperm.xlu0 %63, %v57
    %v65 = vpop.permute.xlu0 %64
    %68 = vset.pattern.permute.xlu0 0
    %69 = vperm.xlu0 %68, %v58
    %v70 = vpop.permute.xlu0 %69
    %v72 = vlaneseq
    %v73 = vshrl.u32 %v72, 7
    %v74 = vsub.s32 0, %v73
    %v75 = vrot.slane %v60, %v74
    %v76 = vmul.f32 %v65, %v75
    %v77 = vmul.f32 %v70, %v75
    %v79 = vlaneseq
    %v80 = vshrl.u32 %v79, 7
    %v81 = vsub.s32 0, %v80
    %v82 = vrot.slane %v61, %v81
    %v84 = vadd.f32 %v82, %v76
    %v85 = vadd.f32 %v82, %v77
    %86 = vset.pattern.permute.xlu0 1
    %87 = vperm.xlu0 %86, %v57
    %v88 = vpop.permute.xlu0 %87
    %90 = vset.pattern.permute.xlu0 1
    %91 = vperm.xlu0 %90, %v58
    %v92 = vpop.permute.xlu0 %91
    %v94 = vlaneseq
    %v95 = vshrl.u32 %v94, 7
    %v96 = vsub.s32 1, %v95
    %v97 = vrot.slane %v60, %v96
    %v98 = vmul.f32 %v88, %v97
    %v99 = vmul.f32 %v92, %v97
    %v100 = vadd.f32 %v84, %v98
    %v101 = vadd.f32 %v85, %v99
    %102 = vset.pattern.permute.xlu0 2
    %103 = vperm.xlu0 %102, %v57
    %v104 = vpop.permute.xlu0 %103
    %106 = vset.pattern.permute.xlu0 2
    %107 = vperm.xlu0 %106, %v58
    %v108 = vpop.permute.xlu0 %107
    %v110 = vlaneseq
    %v111 = vshrl.u32 %v110, 7
    %v112 = vsub.s32 2, %v111
    %v113 = vrot.slane %v60, %v112
    %v114 = vmul.f32 %v104, %v113
    %v115 = vmul.f32 %v108, %v113
    %v116 = vadd.f32 %v100, %v114
    %v117 = vadd.f32 %v101, %v115
    %118 = vset.pattern.permute.xlu0 3
    %119 = vperm.xlu0 %118, %v57
    %v120 = vpop.permute.xlu0 %119
    %122 = vset.pattern.permute.xlu0 3
    %123 = vperm.xlu0 %122, %v58
    %v124 = vpop.permute.xlu0 %123
    %v126 = vlaneseq
    %v127 = vshrl.u32 %v126, 7
    %v128 = vsub.s32 3, %v127
    %v129 = vrot.slane %v60, %v128
    %v130 = vmul.f32 %v120, %v129
    %v131 = vmul.f32 %v124, %v129
    %v132 = vadd.f32 %v116, %v130
    %v133 = vadd.f32 %v117, %v131
    %134 = vset.pattern.permute.xlu0 4
    %135 = vperm.xlu0 %134, %v57
    %v136 = vpop.permute.xlu0 %135
    %138 = vset.pattern.permute.xlu0 4
    %139 = vperm.xlu0 %138, %v58
    %v140 = vpop.permute.xlu0 %139
    %v142 = vlaneseq
    %v143 = vshrl.u32 %v142, 7
    %v144 = vsub.s32 4, %v143
    %v145 = vrot.slane %v60, %v144
    %v146 = vmul.f32 %v136, %v145
    %v147 = vmul.f32 %v140, %v145
    %v148 = vadd.f32 %v132, %v146
    %v149 = vadd.f32 %v133, %v147
    %150 = vset.pattern.permute.xlu0 5
    %151 = vperm.xlu0 %150, %v57
    %v152 = vpop.permute.xlu0 %151
    %154 = vset.pattern.permute.xlu0 5
    %155 = vperm.xlu0 %154, %v58
    %v156 = vpop.permute.xlu0 %155
    %v158 = vlaneseq
    %v159 = vshrl.u32 %v158, 7
    %v160 = vsub.s32 5, %v159
    %v161 = vrot.slane %v60, %v160
    %v162 = vmul.f32 %v152, %v161
    %v163 = vmul.f32 %v156, %v161
    %v164 = vadd.f32 %v148, %v162
    %v165 = vadd.f32 %v149, %v163
    %166 = vset.pattern.permute.xlu0 6
    %167 = vperm.xlu0 %166, %v57
    %v168 = vpop.permute.xlu0 %167
    %170 = vset.pattern.permute.xlu0 6
    %171 = vperm.xlu0 %170, %v58
    %v172 = vpop.permute.xlu0 %171
    %v174 = vlaneseq
    %v175 = vshrl.u32 %v174, 7
    %v176 = vsub.s32 6, %v175
    %v177 = vrot.slane %v60, %v176
    %v178 = vmul.f32 %v168, %v177
    %v179 = vmul.f32 %v172, %v177
    %v180 = vadd.f32 %v164, %v178
    %v181 = vadd.f32 %v165, %v179
    %182 = vset.pattern.permute.xlu0 7
    %183 = vperm.xlu0 %182, %v57
    %v184 = vpop.permute.xlu0 %183
    %186 = vset.pattern.permute.xlu0 7
    %187 = vperm.xlu0 %186, %v58
    %v188 = vpop.permute.xlu0 %187
    %v190 = vlaneseq
    %v191 = vshrl.u32 %v190, 7
    %v192 = vsub.s32 7, %v191
    %v193 = vrot.slane %v60, %v192
    %v194 = vmul.f32 %v184, %v193
    %v195 = vmul.f32 %v188, %v193
    %v196 = vadd.f32 %v180, %v194
    %v197 = vadd.f32 %v181, %v195
    %v198 = vmax.f32 %v196, 0.0
    %v199 = vmax.f32 %v197, 0.0
    %v200 = vpack.c.bf16 %v199, %v198
    %v201 = vld [vmem:[#allocation2] sm:$0xf]
    %v202 = vld [vmem:[#allocation2 + $0x4] sm:$0xf]
    %v203 = vld [vmem:[#allocation2 + $0x8] sm:$0xf]
    %v204 = vld [vmem:[#allocation2 + $0xc] sm:$0xf]
    %v205 = vld [vmem:[#allocation2 + $0x10] sm:$0xf]
    %v206 = vld [vmem:[#allocation2 + $0x14] sm:$0xf]
    %v207 = vld [vmem:[#allocation2 + $0x18] sm:$0xf]
    %v208 = vld [vmem:[#allocation2 + $0x1c] sm:$0xf]
    %v209 = vld [vmem:[#allocation2 + $0x20] sm:$0xf]
    %v210 = vld [vmem:[#allocation2 + $0x24] sm:$0xf]
    %v211 = vld [vmem:[#allocation2 + $0x28] sm:$0xf]
    %v212 = vld [vmem:[#allocation2 + $0x2c] sm:$0xf]
    %v213 = vld [vmem:[#allocation2 + $0x30] sm:$0xf]
    %v214 = vld [vmem:[#allocation2 + $0x34] sm:$0xf]
    %v215 = vld [vmem:[#allocation2 + $0x38] sm:$0xf]
    %v216 = vld [vmem:[#allocation2 + $0x3c] sm:$0xf]
    %v217 = vld [vmem:[%s4] sm:$0x1]
    %v219 = vlaneseq
    %v220 = vshrl.u32 %v219, 7
    %v221 = vsub.s32 0, %v220
    %v222 = vrot.slane %v217, %v221
    %v240 = vunpack.c.l.b16 %v201
    %v241 = vunpack.c.l.b16 %v202
    %v242 = vunpack.c.l.b16 %v203
    %v243 = vunpack.c.l.b16 %v204
    %v244 = vunpack.c.l.b16 %v205
    %v245 = vunpack.c.l.b16 %v206
    %v246 = vunpack.c.l.b16 %v207
    %v247 = vunpack.c.l.b16 %v208
    %v248 = vunpack.c.l.b16 %v209
    %v249 = vunpack.c.l.b16 %v210
    %v250 = vunpack.c.l.b16 %v211
    %v251 = vunpack.c.l.b16 %v212
    %v252 = vunpack.c.l.b16 %v213
    %v253 = vunpack.c.l.b16 %v214
    %v254 = vunpack.c.l.b16 %v215
    %v255 = vunpack.c.l.b16 %v216
    %v256 = vpack.c.b16 %v241, %v240
    %v257 = vpack.c.b16 %v243, %v242
    %v258 = vpack.c.b16 %v245, %v244
    %v259 = vpack.c.b16 %v247, %v246
    %v260 = vpack.c.b16 %v249, %v248
    %v261 = vpack.c.b16 %v251, %v250
    %v262 = vpack.c.b16 %v253, %v252
    %v263 = vpack.c.b16 %v255, %v254
    %272 = vmatprep.subr.bf16.mxu0 0
    %273 = vmatpush1.bf16.msra.mxu0 %v263
    %274 = vmatprep.subr.bf16.mxu0 0
    %275 = vmatpush1.bf16.msra.mxu0 %v262
    %276 = vmatprep.subr.bf16.mxu0 0
    %277 = vmatpush1.bf16.msra.mxu0 %v261
    %278 = vmatprep.subr.bf16.mxu0 0
    %279 = vmatpush1.bf16.msra.mxu0 %v260
    %280 = vmatprep.subr.bf16.mxu0 0
    %281 = vmatpush1.bf16.msra.mxu0 %v259
    %282 = vmatprep.subr.bf16.mxu0 0
    %283 = vmatpush1.bf16.msra.mxu0 %v258
    %284 = vmatprep.subr.bf16.mxu0 0
    %285 = vmatpush1.bf16.msra.mxu0 %v257
    %286 = vmatprep.subr.bf16.mxu0 0
    %287 = vmatpush1.bf16.msra.mxu0 %v256
    %288 = vmatprep.subr.bf16.mxu0 0
    %289 = vmatpush2.bf16.msra.mxu0 0
    %290 = vmatprep.subr.bf16.mxu0 0
    %291 = vmatpush2.bf16.msra.mxu0 0
    %292 = vmatprep.subr.bf16.mxu0 0
    %293 = vmatpush2.bf16.msra.mxu0 0
    %294 = vmatprep.subr.bf16.mxu0 0
    %295 = vmatpush2.bf16.msra.mxu0 0
    %296 = vmatprep.subr.bf16.mxu0 0
    %297 = vmatpush2.bf16.msra.mxu0 0
    %298 = vmatprep.subr.bf16.mxu0 0
    %299 = vmatpush2.bf16.msra.mxu0 0
    %300 = vmatprep.subr.bf16.mxu0 0
    %301 = vmatpush2.bf16.msra.mxu0 0
    %302 = vmatprep.subr.bf16.mxu0 0
    %303 = vmatpush2.bf16.msra.mxu0 0
    %304 = vmatprep.mubr.bf16.mxu0 0
    %305 = vmatmul.mubr.bf16.gmra.mxu0 %v200
    %v306 = vpop.f32.mrf.mxu0
    %v307 = vadd.f32 %v222, %v306
    %v308 = vpop.f32.mrf.mxu0
    %v309 = vpop.f32.mrf.mxu0
    %v310 = vadd.f32 %v222, %v309
    %v311 = vpop.f32.mrf.mxu0
    %312 = vdwg.mxu0
    %v313 = vmax.f32 %v307, 0.0
    %v314 = vmax.f32 %v310, 0.0
    %v315 = vpack.c.bf16 %v314, %v313
    %v316 = vld [vmem:[#allocation4] sm:$0xf]
    %v317 = vld [vmem:[#allocation4 + $0x4] sm:$0xf]
    %v318 = vld [vmem:[#allocation4 + $0x8] sm:$0xf]
    %v319 = vld [vmem:[#allocation4 + $0xc] sm:$0xf]
    %v320 = vld [vmem:[#allocation4 + $0x10] sm:$0xf]
    %v321 = vld [vmem:[#allocation4 + $0x14] sm:$0xf]
    %v322 = vld [vmem:[#allocation4 + $0x18] sm:$0xf]
    %v323 = vld [vmem:[#allocation4 + $0x1c] sm:$0xf]
    %v324 = vld [vmem:[#allocation4 + $0x20] sm:$0xf]
    %v325 = vld [vmem:[#allocation4 + $0x24] sm:$0xf]
    %v326 = vld [vmem:[#allocation4 + $0x28] sm:$0xf]
    %v327 = vld [vmem:[#allocation4 + $0x2c] sm:$0xf]
    %v328 = vld [vmem:[#allocation4 + $0x30] sm:$0xf]
    %v329 = vld [vmem:[#allocation4 + $0x34] sm:$0xf]
    %v330 = vld [vmem:[#allocation4 + $0x38] sm:$0xf]
    %v331 = vld [vmem:[#allocation4 + $0x3c] sm:$0xf]
    %v332 = vld [vmem:[%s6] sm:$0x1]
    %v334 = vlaneseq
    %v335 = vshrl.u32 %v334, 7
    %v336 = vsub.s32 0, %v335
    %v337 = vrot.slane %v332, %v336
    %v355 = vunpack.c.l.b16 %v316
    %v356 = vunpack.c.l.b16 %v317
    %v357 = vunpack.c.l.b16 %v318
    %v358 = vunpack.c.l.b16 %v319
    %v359 = vunpack.c.l.b16 %v320
    %v360 = vunpack.c.l.b16 %v321
    %v361 = vunpack.c.l.b16 %v322
    %v362 = vunpack.c.l.b16 %v323
    %v363 = vunpack.c.l.b16 %v324
    %v364 = vunpack.c.l.b16 %v325
    %v365 = vunpack.c.l.b16 %v326
    %v366 = vunpack.c.l.b16 %v327
    %v367 = vunpack.c.l.b16 %v328
    %v368 = vunpack.c.l.b16 %v329
    %v369 = vunpack.c.l.b16 %v330
    %v370 = vunpack.c.l.b16 %v331
    %v371 = vpack.c.b16 %v356, %v355
    %v372 = vpack.c.b16 %v358, %v357
    %v373 = vpack.c.b16 %v360, %v359
    %v374 = vpack.c.b16 %v362, %v361
    %v375 = vpack.c.b16 %v364, %v363
    %v376 = vpack.c.b16 %v366, %v365
    %v377 = vpack.c.b16 %v368, %v367
    %v378 = vpack.c.b16 %v370, %v369
    %387 = vmatprep.subr.bf16.mxu0 0
    %388 = vmatpush1.bf16.msra.mxu0 %v378
    %389 = vmatprep.subr.bf16.mxu0 0
    %390 = vmatpush1.bf16.msra.mxu0 %v377
    %391 = vmatprep.subr.bf16.mxu0 0
    %392 = vmatpush1.bf16.msra.mxu0 %v376
    %393 = vmatprep.subr.bf16.mxu0 0
    %394 = vmatpush1.bf16.msra.mxu0 %v375
    %395 = vmatprep.subr.bf16.mxu0 0
    %396 = vmatpush1.bf16.msra.mxu0 %v374
    %397 = vmatprep.subr.bf16.mxu0 0
    %398 = vmatpush1.bf16.msra.mxu0 %v373
    %399 = vmatprep.subr.bf16.mxu0 0
    %400 = vmatpush1.bf16.msra.mxu0 %v372
    %401 = vmatprep.subr.bf16.mxu0 0
    %402 = vmatpush1.bf16.msra.mxu0 %v371
    %403 = vmatprep.subr.bf16.mxu0 0
    %404 = vmatpush2.bf16.msra.mxu0 0
    %405 = vmatprep.subr.bf16.mxu0 0
    %406 = vmatpush2.bf16.msra.mxu0 0
    %407 = vmatprep.subr.bf16.mxu0 0
    %408 = vmatpush2.bf16.msra.mxu0 0
    %409 = vmatprep.subr.bf16.mxu0 0
    %410 = vmatpush2.bf16.msra.mxu0 0
    %411 = vmatprep.subr.bf16.mxu0 0
    %412 = vmatpush2.bf16.msra.mxu0 0
    %413 = vmatprep.subr.bf16.mxu0 0
    %414 = vmatpush2.bf16.msra.mxu0 0
    %415 = vmatprep.subr.bf16.mxu0 0
    %416 = vmatpush2.bf16.msra.mxu0 0
    %417 = vmatprep.subr.bf16.mxu0 0
    %418 = vmatpush2.bf16.msra.mxu0 0
    %419 = vmatprep.mubr.bf16.mxu0 0
    %420 = vmatmul.mubr.bf16.gmra.mxu0 %v315
    %v421 = vpop.f32.mrf.mxu0
    %v422 = vadd.f32 %v337, %v421
    %v423 = vpop.f32.mrf.mxu0
    %v424 = vpop.f32.mrf.mxu0
    %v425 = vadd.f32 %v337, %v424
    %v426 = vpop.f32.mrf.mxu0
    %427 = vdwg.mxu0
    %vm428 = vcmask 15360
    %429 = vst.msk [vmem:[%s7] sm:$0xff] %vm428, %v422
    %430 = vst.msk [vmem:[%s7 + $0x8] sm:$0xff] %vm428, %v425
    // Predicated region
    $region38: #{dqn_forward.1} parent=1 // pred_check
      _
    $region39: #{dqn_forward.1} parent=1 // pred_check_branch
      %432 = sbr.rel (0) target = $region41
    $region40: #{dqn_forward.1} parent=1 // pred_region
      _
    $region41: #{dqn_forward.1} parent=1 // pred_fallthru
      _
    // Predicated region
    $region42: #{dqn_forward.1} parent=1 // pred_check
      _
    $region43: #{dqn_forward.1} parent=1 // pred_check_branch
      %434 = sbr.rel (0) target = $region45
    $region44: #{dqn_forward.1} parent=1 // pred_region
      _
    $region45: #{dqn_forward.1} parent=1 // pred_fallthru
      _
    %435 = vsyncpa [#allocation3], 1
    %436 = vsyncpa [#allocation5], 1

</llo_original>
